<compile_context>
chip_gen: v7x
topology: tpu7x:2x2x1
jax: 0.10.0
libtpu: 0.0.40
codegen_flags: <defaults>
</compile_context>

<pallas_src>
import functools

import jax
import jax.numpy as jnp
from jax.experimental import pallas as pl
from jax.experimental.pallas import tpu as pltpu


def _round_up(n, m):
    return (n + m - 1) // m * m


def _pad2d(a, rows, cols):
    r, c = a.shape
    return jnp.pad(a, ((0, rows - r), (0, cols - c)))


# ---------------------------------------------------------------------------
# Fused MLP kernel: one grid step pushes one batch tile through all layers.
# Intermediate activations never touch HBM.
# ---------------------------------------------------------------------------
def _fused_mlp_kernel(n_inner, x_ref, *refs):
    # refs = [w0, b0, w1, b1, ..., w_{n_inner-1}, b_{n_inner-1}, w_out, o_ref]
    o_ref = refs[-1]
    w_out_ref = refs[-2]

    x = x_ref[...]                                   # bf16 [TB, K]
    for i in range(n_inner):
        w_ref = refs[2 * i]                          # bf16 [K, N_pad]
        b_ref = refs[2 * i + 1]                      # f32  [1, N_pad]
        y = jnp.dot(x, w_ref[...], preferred_element_type=jnp.float32)
        # bias-add + ReLU stay in f32 on the VPU (v5e has no bf16 VALU/EUP);
        # cast back to bf16 only for the next MXU pass.
        x = jnp.maximum(y + b_ref[...], 0.0).astype(jnp.bfloat16)

    # Output layer (no bias) + sigmoid: exp and reciprocal both land on the EUP.
    y = jnp.dot(x, w_out_ref[...], preferred_element_type=jnp.float32)
    o_ref[...] = pl.reciprocal(1.0 + jnp.exp(-y), approx=True).astype(o_ref.dtype)


# ---------------------------------------------------------------------------
# One-time parameter preparation (hoisted out of the per-call path).
# ---------------------------------------------------------------------------
def prepare_params(params):
    """Pad + cast parameters once.

    First-layer weights keep their real input width (x is not feature-padded);
    all layer output widths (and the input widths of later layers) are padded
    to multiples of 128 so every activation / store is lane-dense.
    Weights are stored bf16 (MXU operands), biases f32 (VPU epilogue).
    """
    inner = params["inner"]
    w_out = params["out_w"]
    d0 = inner[0][0].shape[0] if inner else w_out.shape[0]
    dims = [d0] + [w.shape[1] for (w, _) in inner] + [w_out.shape[1]]
    pdims = [dims[0]] + [_round_up(d, 128) for d in dims[1:]]

    prepared = {"inner": [], "out_w": None}
    for li, (w, b) in enumerate(inner):
        in_p, out_p = pdims[li], pdims[li + 1]
        prepared["inner"].append((
            _pad2d(w, in_p, out_p).astype(jnp.bfloat16),
            _pad2d(b, 1, out_p).astype(jnp.float32),
        ))
    prepared["out_w"] = _pad2d(w_out, pdims[-2], pdims[-1]).astype(jnp.bfloat16)
    return prepared


# ---------------------------------------------------------------------------
# Wrapper: one fused pallas_call over batch tiles.
# ---------------------------------------------------------------------------
@functools.partial(jax.jit, static_argnames=("out_features", "batch_tile"))
def mlp_forward(x, prepared, out_features, batch_tile=512):
    """x: [B, d0] (bf16 preferred); prepared: from prepare_params()."""
    inner = prepared["inner"]
    w_out = prepared["out_w"]

    if x.dtype != jnp.bfloat16:
        # Callers should pass bf16 to avoid this extra conversion pass.
        x = x.astype(jnp.bfloat16)

    B, d0 = x.shape
    n_inner = len(inner)

    # Batch tile: big (512) to amortize per-step overhead and hit the HBM
    # roofline; clamped to B so tiny batches run as a single full block.
    TB = min(batch_tile, B)
    grid = (pl.cdiv(B, TB),)

    resident = 0                      # resident VMEM block footprint (bytes)

    args = [x]
    in_specs = [pl.BlockSpec((TB, d0), lambda i: (i, 0))]
    resident += 2 * TB * d0 * 2       # x block, bf16, double-buffered

    hidden_widths = []
    for (w, b) in inner:
        in_d, out_d = w.shape
        args += [w, b]
        # Grid-invariant blocks: single-buffer them (index_map is constant).
        in_specs.append(pl.BlockSpec((in_d, out_d), lambda i: (0, 0),
                                     pipeline_mode=pl.Buffered(1)))
        in_specs.append(pl.BlockSpec((1, out_d), lambda i: (0, 0),
                                     pipeline_mode=pl.Buffered(1)))
        resident += in_d * out_d * 2 + out_d * 4
        hidden_widths.append(out_d)

    in_d, out_pd = w_out.shape
    args.append(w_out)
    in_specs.append(pl.BlockSpec((in_d, out_pd), lambda i: (0, 0),
                                 pipeline_mode=pl.Buffered(1)))
    resident += in_d * out_pd * 2
    hidden_widths.append(out_pd)

    out_spec = pl.BlockSpec((TB, out_pd), lambda i: (i, 0))
    resident += 2 * TB * out_pd * 4                  # output block, f32, 2 bufs
    resident += 2 * TB * max(hidden_widths) * 4      # live f32 activations (est.)

    cp_kwargs = dict(dimension_semantics=("parallel",))
    if resident > 16 * 1024 * 1024:
        # Only override the scoped-VMEM default when we actually need more.
        cp_kwargs["vmem_limit_bytes"] = int(resident * 1.5)

    out_padded = pl.pallas_call(
        functools.partial(_fused_mlp_kernel, n_inner),
        out_shape=jax.ShapeDtypeStruct((B, out_pd), jnp.float32),
        grid=grid,
        in_specs=in_specs,
        out_specs=out_spec,
        compiler_params=pltpu.CompilerParams(**cp_kwargs),
    )(*args)

    # Kernel keeps the 128-wide lane-dense store (unmasked vst); slice the real
    # columns once here.  Consumers that can take the padded slab should.
    return out_padded[:, :out_features]


# ---------------------------------------------------------------------------
# Parameter construction (mimics nn.Linear default init) + pure-JAX reference
# ---------------------------------------------------------------------------
def init_mlp_params(key, layer_dims):
    """Weights stored [in, out] (transposed vs PyTorch's [out, in]); bias [1, out]."""
    params = {"inner": [], "out_w": None}
    n_layers = len(layer_dims) - 1
    for i in range(n_layers - 1):
        fan_in, fan_out = layer_dims[i], layer_dims[i + 1]
        key, kw, kb = jax.random.split(key, 3)
        bound = 1.0 / (fan_in ** 0.5)
        w = jax.random.uniform(kw, (fan_in, fan_out), jnp.float32, -bound, bound)
        b = jax.random.uniform(kb, (1, fan_out), jnp.float32, -bound, bound)
        params["inner"].append((w, b))
    fan_in, fan_out = layer_dims[n_layers - 1], layer_dims[n_layers]
    key, kw = jax.random.split(key)
    bound = 1.0 / (fan_in ** 0.5)
    params["out_w"] = jax.random.uniform(
        kw, (fan_in, fan_out), jnp.float32, -bound, bound)
    return params


def mlp_forward_ref(x, params):
    """Pure-JAX f32 reference for correctness checking."""
    for (w, b) in params["inner"]:
        x = jax.nn.relu(x @ w + b)
    return jax.nn.sigmoid(x @ params["out_w"])


# ---------------------------------------------------------------------------
if __name__ == "__main__":
    key = jax.random.PRNGKey(0)

    # layer_dims: 2 inner (Linear+ReLU) layers + output Linear (no bias) + sigmoid
    layer_dims = [32, 64, 64, 16]
    batch = 200          # deliberately not a multiple of 8*lanes or batch tiles

    key, kx, kp = jax.random.split(key, 3)
    x = jax.random.normal(kx, (batch, layer_dims[0]), jnp.float32)
    params = init_mlp_params(kp, layer_dims)

    prepared = prepare_params(params)       # one-time pad + bf16 cast

    out = mlp_forward(x.astype(jnp.bfloat16), prepared,
                      out_features=layer_dims[-1])
    out = jax.block_until_ready(out)

    # sanity check vs pure-JAX f32 reference (bf16 MXU operands + approx
    # reciprocal introduce small error; sigmoid output is in [0, 1])
    ref = mlp_forward_ref(x, params)
    assert out.shape == (batch, layer_dims[-1])
    assert jnp.allclose(out, ref, atol=2e-2, rtol=0.0), \
        float(jnp.max(jnp.abs(out - ref)))

    print("KERNEL_OK")
</pallas_src>

<mosaic_0001>
module attributes {stable_mosaic.version = 11 : i64} {
  func.func @_fused_mlp_kernel(%arg0: i32, %arg1: memref<200x32xbf16, #tpu.memory_space<vmem>>, %arg2: memref<32x128xbf16, #tpu.memory_space<vmem>>, %arg3: memref<1x128xf32, #tpu.memory_space<vmem>>, %arg4: memref<128x128xbf16, #tpu.memory_space<vmem>>, %arg5: memref<1x128xf32, #tpu.memory_space<vmem>>, %arg6: memref<128x128xbf16, #tpu.memory_space<vmem>>, %arg7: memref<200x128xf32, #tpu.memory_space<vmem>>) attributes {dimension_semantics = [#tpu.dimension_semantics<parallel>], iteration_bounds = array<i64: 1>, scalar_prefetch = 0 : i64, scratch_operands = 0 : i64, tpu.core_type = #tpu.core_type<tc>, window_params = [{transform_indices = @transform_0, window_bounds = array<i64: 200, 32>}, {pipeline_mode = #tpu.pipeline_mode<synchronous>, transform_indices = @transform_1, window_bounds = array<i64: 32, 128>}, {pipeline_mode = #tpu.pipeline_mode<synchronous>, transform_indices = @transform_2, window_bounds = array<i64: 1, 128>}, {pipeline_mode = #tpu.pipeline_mode<synchronous>, transform_indices = @transform_3, window_bounds = array<i64: 128, 128>}, {pipeline_mode = #tpu.pipeline_mode<synchronous>, transform_indices = @transform_4, window_bounds = array<i64: 1, 128>}, {pipeline_mode = #tpu.pipeline_mode<synchronous>, transform_indices = @transform_5, window_bounds = array<i64: 128, 128>}, {transform_indices = @transform_6, window_bounds = array<i64: 200, 128>}]} {
    %c0 = arith.constant 0 : index
    %c0_0 = arith.constant 0 : index
    %0 = vector.load %arg1[%c0, %c0_0] : memref<200x32xbf16, #tpu.memory_space<vmem>>, vector<200x32xbf16>
    %c0_1 = arith.constant 0 : index
    %c0_2 = arith.constant 0 : index
    %1 = vector.load %arg2[%c0_1, %c0_2] : memref<32x128xbf16, #tpu.memory_space<vmem>>, vector<32x128xbf16>
    %cst = arith.constant dense<0.000000e+00> : vector<200x128xf32>
    %2 = tpu.matmul %0, %1, %cst {dimension_numbers = #tpu.dot_dimension_numbers<[1], [0], [0], [1], [0, 0, 1, 1], [], []>} : vector<200x32xbf16>, vector<32x128xbf16>, vector<200x128xf32> -> vector<200x128xf32>
    %c0_3 = arith.constant 0 : index
    %c0_4 = arith.constant 0 : index
    %3 = vector.load %arg3[%c0_3, %c0_4] : memref<1x128xf32, #tpu.memory_space<vmem>>, vector<1x128xf32>
    %4 = vector.broadcast %3 : vector<1x128xf32> to vector<200x128xf32>
    %5 = arith.addf %2, %4 : vector<200x128xf32>
    %cst_5 = arith.constant 0.000000e+00 : f32
    %6 = vector.broadcast %cst_5 : f32 to vector<200x128xf32>
    %7 = arith.maximumf %5, %6 : vector<200x128xf32>
    %8 = arith.truncf %7 : vector<200x128xf32> to vector<200x128xbf16>
    %c0_6 = arith.constant 0 : index
    %c0_7 = arith.constant 0 : index
    %9 = vector.load %arg4[%c0_6, %c0_7] : memref<128x128xbf16, #tpu.memory_space<vmem>>, vector<128x128xbf16>
    %cst_8 = arith.constant dense<0.000000e+00> : vector<200x128xf32>
    %10 = tpu.matmul %8, %9, %cst_8 {dimension_numbers = #tpu.dot_dimension_numbers<[1], [0], [0], [1], [0, 0, 1, 1], [], []>} : vector<200x128xbf16>, vector<128x128xbf16>, vector<200x128xf32> -> vector<200x128xf32>
    %c0_9 = arith.constant 0 : index
    %c0_10 = arith.constant 0 : index
    %11 = vector.load %arg5[%c0_9, %c0_10] : memref<1x128xf32, #tpu.memory_space<vmem>>, vector<1x128xf32>
    %12 = vector.broadcast %11 : vector<1x128xf32> to vector<200x128xf32>
    %13 = arith.addf %10, %12 : vector<200x128xf32>
    %cst_11 = arith.constant 0.000000e+00 : f32
    %14 = vector.broadcast %cst_11 : f32 to vector<200x128xf32>
    %15 = arith.maximumf %13, %14 : vector<200x128xf32>
    %16 = arith.truncf %15 : vector<200x128xf32> to vector<200x128xbf16>
    %c0_12 = arith.constant 0 : index
    %c0_13 = arith.constant 0 : index
    %17 = vector.load %arg6[%c0_12, %c0_13] : memref<128x128xbf16, #tpu.memory_space<vmem>>, vector<128x128xbf16>
    %cst_14 = arith.constant dense<0.000000e+00> : vector<200x128xf32>
    %18 = tpu.matmul %16, %17, %cst_14 {dimension_numbers = #tpu.dot_dimension_numbers<[1], [0], [0], [1], [0, 0, 1, 1], [], []>} : vector<200x128xbf16>, vector<128x128xbf16>, vector<200x128xf32> -> vector<200x128xf32>
    %cst_15 = arith.constant 0.000000e+00 : f32
    %19 = vector.broadcast %cst_15 : f32 to vector<200x128xf32>
    %20 = arith.subf %19, %18 : vector<200x128xf32>
    %21 = math.exp %20 : vector<200x128xf32>
    %cst_16 = arith.constant 1.000000e+00 : f32
    %22 = vector.broadcast %cst_16 : f32 to vector<200x128xf32>
    %23 = arith.addf %22, %21 : vector<200x128xf32>
    %24 = tpu.reciprocal %23 {approx = true} : vector<200x128xf32> -> vector<200x128xf32>
    %c0_17 = arith.constant 0 : index
    %c0_18 = arith.constant 0 : index
    %25 = vector.load %arg7[%c0_17, %c0_18] : memref<200x128xf32, #tpu.memory_space<vmem>>, vector<200x128xf32>
    tpu.vector_store %arg7[%c0_17, %c0_18], %24 {strides = array<i32>} : memref<200x128xf32, #tpu.memory_space<vmem>>, vector<200x128xf32>,
    return
  }
  func.func @transform_0(%arg0: i32) -> (i32, i32) {
    %c0_i32 = arith.constant 0 : i32
    %c0_i32_0 = arith.constant 0 : i32
    return %arg0, %c0_i32 : i32, i32
  }
  func.func @transform_1(%arg0: i32) -> (i32, i32) {
    %c0_i32 = arith.constant 0 : i32
    %c0_i32_0 = arith.constant 0 : i32
    %c0_i32_1 = arith.constant 0 : i32
    return %c0_i32, %c0_i32_0 : i32, i32
  }
  func.func @transform_2(%arg0: i32) -> (i32, i32) {
    %c0_i32 = arith.constant 0 : i32
    %c0_i32_0 = arith.constant 0 : i32
    %c0_i32_1 = arith.constant 0 : i32
    return %c0_i32, %c0_i32_0 : i32, i32
  }
  func.func @transform_3(%arg0: i32) -> (i32, i32) {
    %c0_i32 = arith.constant 0 : i32
    %c0_i32_0 = arith.constant 0 : i32
    %c0_i32_1 = arith.constant 0 : i32
    return %c0_i32, %c0_i32_0 : i32, i32
  }
  func.func @transform_4(%arg0: i32) -> (i32, i32) {
    %c0_i32 = arith.constant 0 : i32
    %c0_i32_0 = arith.constant 0 : i32
    %c0_i32_1 = arith.constant 0 : i32
    return %c0_i32, %c0_i32_0 : i32, i32
  }
  func.func @transform_5(%arg0: i32) -> (i32, i32) {
    %c0_i32 = arith.constant 0 : i32
    %c0_i32_0 = arith.constant 0 : i32
    %c0_i32_1 = arith.constant 0 : i32
    return %c0_i32, %c0_i32_0 : i32, i32
  }
  func.func @transform_6(%arg0: i32) -> (i32, i32) {
    %c0_i32 = arith.constant 0 : i32
    %c0_i32_0 = arith.constant 0 : i32
    return %arg0, %c0_i32 : i32, i32
  }
}

</mosaic_0001>

<llo_original>
// kernel: mlp_forward.1
$region0: #{mlp_forward.1}
  #allocation0 [shape = 'u32[]', space=smem, size = 0x4, offset = 0x4, fixed_abs, tag = 'smem constant byte address 0x4 - core index']
  #allocation1 [shape = 'u32[144,128]{1,0:T(1,128)}', space=vmem, size = 0x12000, scoped, tag = 'internal scratch']
  %s0 = inlined_call_operand.vmem [shape: bf16[200,32], index: 0, kind: input, shape index: {}]
  %s1 = inlined_call_operand.hbm [shape: bf16[32,128], index: 1, kind: input, shape index: {}]
  %s2 = inlined_call_operand.vmem [shape: f32[1,128], index: 2, kind: input, shape index: {}]
  %s3 = inlined_call_operand.vmem [shape: bf16[128,128], index: 3, kind: input, shape index: {}]
  %s4 = inlined_call_operand.vmem [shape: f32[1,128], index: 4, kind: input, shape index: {}]
  %s5 = inlined_call_operand.vmem [shape: bf16[128,128], index: 5, kind: input, shape index: {}]
  %s6 = inlined_call_operand.vmem [shape: f32[200,128], index: 6, kind: output, shape index: {}]
  %s7 = sld [smem:[#allocation0]]
  $region38: #{mlp_forward.1} parent=0
    _
  %s9 = ssub.s32 1, %s7
  %s10 = scalar_select 0, %s9, %s7
  $region1: #{mlp_forward.1} parent=0
    #allocation2 [shape = 'u8[8192]{0}', space=vmem, size = 0x2000, scoped, tag = 'input window, operand 1, single buffered']
    #allocation3 [shape = 's32[1]{0}', space=sflag, size = 0x4, scoped, tag = 'scoped memory for mlp_forward.1']
    %11 = vsyncpa [#allocation3], 0
    // Predicated region
    $region2: #{mlp_forward.1} parent=1 // pred_check
      _
    $region3: #{mlp_forward.1} parent=1 // pred_check_branch
      %13 = sbr.rel (0) target = $region5
    $region4: #{mlp_forward.1} parent=1 // pred_region
      _
    $region5: #{mlp_forward.1} parent=1 // pred_fallthru
      _
    // Predicated region
    $region6: #{mlp_forward.1} parent=1 // pred_check
      _
    $region7: #{mlp_forward.1} parent=1 // pred_check_branch
      %15 = sbr.rel (0) target = $region9
    $region8: #{mlp_forward.1} parent=1 // pred_region
      %s17 = ssub.s32 256, 256
      %18 = vsyncadd [#allocation3], %s17
      %s19 = sshll.u32 [#allocation2], 4
      %s20 = int_to_ptr.vmem [resolvable:$true] %s19
      %25 = dma.hbm_to_vmem [thread:$0]  %s1, 256, %s20, [#allocation3], 64, 64, 4
    $region9: #{mlp_forward.1} parent=1 // pred_fallthru
      _
    // Predicated region
    $region10: #{mlp_forward.1} parent=1 // pred_check
      _
    $region11: #{mlp_forward.1} parent=1 // pred_check_branch
      %27 = sbr.rel (0) target = $region13
    $region12: #{mlp_forward.1} parent=1 // pred_region
      _
    $region13: #{mlp_forward.1} parent=1 // pred_fallthru
      _
    // Predicated region
    $region14: #{mlp_forward.1} parent=1 // pred_check
      _
    $region15: #{mlp_forward.1} parent=1 // pred_check_branch
      %29 = sbr.rel (0) target = $region17
    $region16: #{mlp_forward.1} parent=1 // pred_region
      _
    $region17: #{mlp_forward.1} parent=1 // pred_fallthru
      _
    // Predicated region
    $region18: #{mlp_forward.1} parent=1 // pred_check
      _
    $region19: #{mlp_forward.1} parent=1 // pred_check_branch
      %31 = sbr.rel (0) target = $region21
    $region20: #{mlp_forward.1} parent=1 // pred_region
      _
    $region21: #{mlp_forward.1} parent=1 // pred_fallthru
      _
    // Predicated region
    $region22: #{mlp_forward.1} parent=1 // pred_check
      _
    $region23: #{mlp_forward.1} parent=1 // pred_check_branch
      %33 = sbr.rel (0) target = $region25
    $region24: #{mlp_forward.1} parent=1 // pred_region
      _
    $region25: #{mlp_forward.1} parent=1 // pred_fallthru
      _
    // Predicated region
    $region26: #{mlp_forward.1} parent=1 // pred_check
      _
    $region27: #{mlp_forward.1} parent=1 // pred_check_branch
      %35 = sbr.rel (0) target = $region29
    $region28: #{mlp_forward.1} parent=1 // pred_region
      %36 = dma.done [#allocation3], 256
    $region29: #{mlp_forward.1} parent=1 // pred_fallthru
      _
    %v38 = vld [vmem:[%s0] sm:$0xf]
    %v39 = vld [vmem:[%s0 + $0x4] sm:$0xf]
    %v40 = vld [vmem:[%s0 + $0x8] sm:$0xf]
    %v41 = vld [vmem:[%s0 + $0xc] sm:$0xf]
    %v42 = vld [vmem:[%s0 + $0x10] sm:$0xf]
    %v43 = vld [vmem:[%s0 + $0x14] sm:$0xf]
    %v44 = vld [vmem:[%s0 + $0x18] sm:$0xf]
    %v45 = vld [vmem:[%s0 + $0x1c] sm:$0xf]
    %v46 = vld [vmem:[%s0 + $0x20] sm:$0xf]
    %v47 = vld [vmem:[%s0 + $0x24] sm:$0xf]
    %v48 = vld [vmem:[%s0 + $0x28] sm:$0xf]
    %v49 = vld [vmem:[%s0 + $0x2c] sm:$0xf]
    %v50 = vld [vmem:[%s0 + $0x30] sm:$0xf]
    %v51 = vld [vmem:[%s0 + $0x34] sm:$0xf]
    %v52 = vld [vmem:[%s0 + $0x38] sm:$0xf]
    %v53 = vld [vmem:[%s0 + $0x3c] sm:$0xf]
    %v54 = vld [vmem:[%s0 + $0x40] sm:$0xf]
    %v55 = vld [vmem:[%s0 + $0x44] sm:$0xf]
    %v56 = vld [vmem:[%s0 + $0x48] sm:$0xf]
    %v57 = vld [vmem:[%s0 + $0x4c] sm:$0xf]
    %v58 = vld [vmem:[%s0 + $0x50] sm:$0xf]
    %v59 = vld [vmem:[%s0 + $0x54] sm:$0xf]
    %v60 = vld [vmem:[%s0 + $0x58] sm:$0xf]
    %v61 = vld [vmem:[%s0 + $0x5c] sm:$0xf]
    %v62 = vld [vmem:[%s0 + $0x60] sm:$0xf]
    %v63 = vld [vmem:[#allocation2] sm:$0xf]
    %v64 = vld [vmem:[#allocation2 + $0x4] sm:$0xf]
    %v65 = vld [vmem:[#allocation2 + $0x8] sm:$0xf]
    %v66 = vld [vmem:[#allocation2 + $0xc] sm:$0xf]
    %v67 = vld [vmem:[%s2] sm:$0x1]
    %v69 = vlaneseq
    %v70 = vshrl.u32 %v69, 7
    %v71 = vsub.s32 0, %v70
    %v72 = vrot.slane %v67, %v71
    %v99 = vunpack.c.l.b16 %v38
    %v100 = vunpack.c.l.b16 %v39
    %v101 = vunpack.c.l.b16 %v40
    %v102 = vunpack.c.l.b16 %v41
    %v103 = vunpack.c.l.b16 %v42
    %v104 = vunpack.c.l.b16 %v43
    %v105 = vunpack.c.l.b16 %v44
    %v106 = vunpack.c.l.b16 %v45
    %v107 = vunpack.c.l.b16 %v46
    %v108 = vunpack.c.l.b16 %v47
    %v109 = vunpack.c.l.b16 %v48
    %v110 = vunpack.c.l.b16 %v49
    %v111 = vunpack.c.l.b16 %v50
    %v112 = vunpack.c.l.b16 %v51
    %v113 = vunpack.c.l.b16 %v52
    %v114 = vunpack.c.l.b16 %v53
    %v115 = vunpack.c.l.b16 %v54
    %v116 = vunpack.c.l.b16 %v55
    %v117 = vunpack.c.l.b16 %v56
    %v118 = vunpack.c.l.b16 %v57
    %v119 = vunpack.c.l.b16 %v58
    %v120 = vunpack.c.l.b16 %v59
    %v121 = vunpack.c.l.b16 %v60
    %v122 = vunpack.c.l.b16 %v61
    %v123 = vunpack.c.l.b16 %v62
    %v124 = vpack.c.b16 %v100, %v99
    %v125 = vpack.c.b16 %v102, %v101
    %v126 = vpack.c.b16 %v104, %v103
    %v127 = vpack.c.b16 %v106, %v105
    %v128 = vpack.c.b16 %v108, %v107
    %v129 = vpack.c.b16 %v110, %v109
    %v130 = vpack.c.b16 %v112, %v111
    %v131 = vpack.c.b16 %v114, %v113
    %v132 = vpack.c.b16 %v116, %v115
    %v133 = vpack.c.b16 %v118, %v117
    %v134 = vpack.c.b16 %v120, %v119
    %v135 = vpack.c.b16 %v122, %v121
    %v136 = vpack.c.b16 %v123, %v123
    %v141 = vunpack.c.l.b16 %v63
    %v142 = vunpack.c.l.b16 %v64
    %v143 = vunpack.c.l.b16 %v65
    %v144 = vunpack.c.l.b16 %v66
    %v145 = vpack.c.b16 %v142, %v141
    %v146 = vpack.c.b16 %v144, %v143
    %vm149 = vcmask 261120
    %v151 = vsel %vm149, %v124, 0
    %v154 = vsel %vm149, %v125, 0
    %v157 = vsel %vm149, %v126, 0
    %v160 = vsel %vm149, %v127, 0
    %v163 = vsel %vm149, %v128, 0
    %v166 = vsel %vm149, %v129, 0
    %v169 = vsel %vm149, %v130, 0
    %v172 = vsel %vm149, %v131, 0
    %v175 = vsel %vm149, %v132, 0
    %v178 = vsel %vm149, %v133, 0
    %v181 = vsel %vm149, %v134, 0
    %v184 = vsel %vm149, %v135, 0
    %v187 = vsel %vm149, %v136, 0
    %189 = vmatprep.subr.bf16.mxu0 0
    %190 = vmatpush1.bf16.msra.mxu0 %v145
    %191 = vmatprep.subr.bf16.mxu0 0
    %192 = vmatpush1.bf16.msra.mxu0 %v146
    %193 = vmatprep.subr.bf16.mxu0 0
    %194 = vmatpush1.bf16.msra.mxu0 0
    %195 = vmatprep.subr.bf16.mxu0 0
    %196 = vmatpush1.bf16.msra.mxu0 0
    %197 = vmatprep.subr.bf16.mxu0 0
    %198 = vmatpush1.bf16.msra.mxu0 0
    %199 = vmatprep.subr.bf16.mxu0 0
    %200 = vmatpush1.bf16.msra.mxu0 0
    %201 = vmatprep.subr.bf16.mxu0 0
    %202 = vmatpush1.bf16.msra.mxu0 0
    %203 = vmatprep.subr.bf16.mxu0 0
    %204 = vmatpush1.bf16.msra.mxu0 0
    %205 = vmatprep.subr.bf16.mxu0 0
    %206 = vmatpush1.bf16.msra.mxu0 0
    %207 = vmatprep.subr.bf16.mxu0 0
    %208 = vmatpush1.bf16.msra.mxu0 0
    %209 = vmatprep.subr.bf16.mxu0 0
    %210 = vmatpush1.bf16.msra.mxu0 0
    %211 = vmatprep.subr.bf16.mxu0 0
    %212 = vmatpush1.bf16.msra.mxu0 0
    %213 = vmatprep.subr.bf16.mxu0 0
    %214 = vmatpush1.bf16.msra.mxu0 0
    %215 = vmatprep.subr.bf16.mxu0 0
    %216 = vmatpush1.bf16.msra.mxu0 0
    %217 = vmatprep.subr.bf16.mxu0 0
    %218 = vmatpush1.bf16.msra.mxu0 0
    %219 = vmatprep.subr.bf16.mxu0 0
    %220 = vmatpush1.bf16.msra.mxu0 0
    %221 = vmatprep.mubr.bf16.mxu0 0
    %222 = vmatmul.mubr.bf16.gmra.mrb[0].mxu0 %v151
    %v223 = vpop.f32.mrb[0].mxu0
    %v224 = vadd.f32 %v72, %v223
    %v225 = vpop.f32.mrb[0].mxu0
    %v226 = vpop.f32.mrb[0].mxu0
    %v227 = vadd.f32 %v72, %v226
    %v228 = vpop.f32.mrb[0].mxu0
    %229 = vmatprep.mubr.bf16.mxu0 0
    %230 = vmatmul.mubr.bf16.gmra.mrb[0].mxu0 %v154
    %v231 = vpop.f32.mrb[0].mxu0
    %v232 = vadd.f32 %v72, %v231
    %v233 = vpop.f32.mrb[0].mxu0
    %v234 = vpop.f32.mrb[0].mxu0
    %v235 = vadd.f32 %v72, %v234
    %v236 = vpop.f32.mrb[0].mxu0
    %237 = vmatprep.mubr.bf16.mxu0 0
    %238 = vmatmul.mubr.bf16.gmra.mrb[0].mxu0 %v157
    %v239 = vpop.f32.mrb[0].mxu0
    %v240 = vadd.f32 %v72, %v239
    %v241 = vpop.f32.mrb[0].mxu0
    %v242 = vpop.f32.mrb[0].mxu0
    %v243 = vadd.f32 %v72, %v242
    %v244 = vpop.f32.mrb[0].mxu0
    %245 = vmatprep.mubr.bf16.mxu0 0
    %246 = vmatmul.mubr.bf16.gmra.mrb[0].mxu0 %v160
    %v247 = vpop.f32.mrb[0].mxu0
    %v248 = vadd.f32 %v72, %v247
    %v249 = vpop.f32.mrb[0].mxu0
    %v250 = vpop.f32.mrb[0].mxu0
    %v251 = vadd.f32 %v72, %v250
    %v252 = vpop.f32.mrb[0].mxu0
    %253 = vmatprep.mubr.bf16.mxu0 0
    %254 = vmatmul.mubr.bf16.gmra.mrb[0].mxu0 %v163
    %v255 = vpop.f32.mrb[0].mxu0
    %v256 = vadd.f32 %v72, %v255
    %v257 = vpop.f32.mrb[0].mxu0
    %v258 = vpop.f32.mrb[0].mxu0
    %v259 = vadd.f32 %v72, %v258
    %v260 = vpop.f32.mrb[0].mxu0
    %261 = vmatprep.mubr.bf16.mxu0 0
    %262 = vmatmul.mubr.bf16.gmra.mrb[0].mxu0 %v166
    %v263 = vpop.f32.mrb[0].mxu0
    %v264 = vadd.f32 %v72, %v263
    %v265 = vpop.f32.mrb[0].mxu0
    %v266 = vpop.f32.mrb[0].mxu0
    %v267 = vadd.f32 %v72, %v266
    %v268 = vpop.f32.mrb[0].mxu0
    %269 = vmatprep.mubr.bf16.mxu0 0
    %270 = vmatmul.mubr.bf16.gmra.mrb[0].mxu0 %v169
    %v271 = vpop.f32.mrb[0].mxu0
    %v272 = vadd.f32 %v72, %v271
    %v273 = vpop.f32.mrb[0].mxu0
    %v274 = vpop.f32.mrb[0].mxu0
    %v275 = vadd.f32 %v72, %v274
    %v276 = vpop.f32.mrb[0].mxu0
    %277 = vmatprep.mubr.bf16.mxu0 0
    %278 = vmatmul.mubr.bf16.gmra.mrb[0].mxu0 %v172
    %v279 = vpop.f32.mrb[0].mxu0
    %v280 = vadd.f32 %v72, %v279
    %v281 = vpop.f32.mrb[0].mxu0
    %v282 = vpop.f32.mrb[0].mxu0
    %v283 = vadd.f32 %v72, %v282
    %v284 = vpop.f32.mrb[0].mxu0
    %285 = vmatprep.mubr.bf16.mxu0 0
    %286 = vmatmul.mubr.bf16.gmra.mrb[0].mxu0 %v175
    %v287 = vpop.f32.mrb[0].mxu0
    %v288 = vadd.f32 %v72, %v287
    %v289 = vpop.f32.mrb[0].mxu0
    %v290 = vpop.f32.mrb[0].mxu0
    %v291 = vadd.f32 %v72, %v290
    %v292 = vpop.f32.mrb[0].mxu0
    %293 = vmatprep.mubr.bf16.mxu0 0
    %294 = vmatmul.mubr.bf16.gmra.mrb[0].mxu0 %v178
    %v295 = vpop.f32.mrb[0].mxu0
    %v296 = vadd.f32 %v72, %v295
    %v297 = vpop.f32.mrb[0].mxu0
    %v298 = vpop.f32.mrb[0].mxu0
    %v299 = vadd.f32 %v72, %v298
    %v300 = vpop.f32.mrb[0].mxu0
    %301 = vmatprep.mubr.bf16.mxu0 0
    %302 = vmatmul.mubr.bf16.gmra.mrb[0].mxu0 %v181
    %v303 = vpop.f32.mrb[0].mxu0
    %v304 = vadd.f32 %v72, %v303
    %v305 = vpop.f32.mrb[0].mxu0
    %v306 = vpop.f32.mrb[0].mxu0
    %v307 = vadd.f32 %v72, %v306
    %v308 = vpop.f32.mrb[0].mxu0
    %309 = vmatprep.mubr.bf16.mxu0 0
    %310 = vmatmul.mubr.bf16.gmra.mrb[0].mxu0 %v184
    %v311 = vpop.f32.mrb[0].mxu0
    %v312 = vadd.f32 %v72, %v311
    %v313 = vpop.f32.mrb[0].mxu0
    %v314 = vpop.f32.mrb[0].mxu0
    %v315 = vadd.f32 %v72, %v314
    %v316 = vpop.f32.mrb[0].mxu0
    %317 = vmatprep.mubr.bf16.mxu0 0
    %318 = vmatmul.mubr.bf16.gmra.mrb[0].mxu0 %v187
    %v319 = vpop.f32.mrb[0].mxu0
    %v320 = vadd.f32 %v72, %v319
    %v321 = vpop.f32.mrb[0].mxu0
    %v322 = vpop.f32.mrb[0].mxu0
    %v323 = vpop.f32.mrb[0].mxu0
    %324 = vdwg.mxu0
    %v325 = vmax.f32 %v224, 0.0
    %v326 = vmax.f32 %v227, 0.0
    %v327 = vmax.f32 %v232, 0.0
    %v328 = vmax.f32 %v235, 0.0
    %v329 = vmax.f32 %v240, 0.0
    %v330 = vmax.f32 %v243, 0.0
    %v331 = vmax.f32 %v248, 0.0
    %v332 = vmax.f32 %v251, 0.0
    %v333 = vmax.f32 %v256, 0.0
    %v334 = vmax.f32 %v259, 0.0
    %v335 = vmax.f32 %v264, 0.0
    %v336 = vmax.f32 %v267, 0.0
    %v337 = vmax.f32 %v272, 0.0
    %v338 = vmax.f32 %v275, 0.0
    %v339 = vmax.f32 %v280, 0.0
    %v340 = vmax.f32 %v283, 0.0
    %v341 = vmax.f32 %v288, 0.0
    %v342 = vmax.f32 %v291, 0.0
    %v343 = vmax.f32 %v296, 0.0
    %v344 = vmax.f32 %v299, 0.0
    %v345 = vmax.f32 %v304, 0.0
    %v346 = vmax.f32 %v307, 0.0
    %v347 = vmax.f32 %v312, 0.0
    %v348 = vmax.f32 %v315, 0.0
    %v349 = vmax.f32 %v320, 0.0
    %v350 = vpack.c.bf16 %v326, %v325
    %v351 = vpack.c.bf16 %v328, %v327
    %v352 = vpack.c.bf16 %v330, %v329
    %v353 = vpack.c.bf16 %v332, %v331
    %v354 = vpack.c.bf16 %v334, %v333
    %v355 = vpack.c.bf16 %v336, %v335
    %v356 = vpack.c.bf16 %v338, %v337
    %v357 = vpack.c.bf16 %v340, %v339
    %v358 = vpack.c.bf16 %v342, %v341
    %v359 = vpack.c.bf16 %v344, %v343
    %v360 = vpack.c.bf16 %v346, %v345
    %v361 = vpack.c.bf16 %v348, %v347
    %v362 = vpack.c.bf16 %v349, %v349
    %v363 = vld [vmem:[%s3] sm:$0xf]
    %v364 = vld [vmem:[%s3 + $0x4] sm:$0xf]
    %v365 = vld [vmem:[%s3 + $0x8] sm:$0xf]
    %v366 = vld [vmem:[%s3 + $0xc] sm:$0xf]
    %v367 = vld [vmem:[%s3 + $0x10] sm:$0xf]
    %v368 = vld [vmem:[%s3 + $0x14] sm:$0xf]
    %v369 = vld [vmem:[%s3 + $0x18] sm:$0xf]
    %v370 = vld [vmem:[%s3 + $0x1c] sm:$0xf]
    %v371 = vld [vmem:[%s3 + $0x20] sm:$0xf]
    %v372 = vld [vmem:[%s3 + $0x24] sm:$0xf]
    %v373 = vld [vmem:[%s3 + $0x28] sm:$0xf]
    %v374 = vld [vmem:[%s3 + $0x2c] sm:$0xf]
    %v375 = vld [vmem:[%s3 + $0x30] sm:$0xf]
    %v376 = vld [vmem:[%s3 + $0x34] sm:$0xf]
    %v377 = vld [vmem:[%s3 + $0x38] sm:$0xf]
    %v378 = vld [vmem:[%s3 + $0x3c] sm:$0xf]
    %v379 = vld [vmem:[%s4] sm:$0x1]
    %v381 = vlaneseq
    %v382 = vshrl.u32 %v381, 7
    %v383 = vsub.s32 0, %v382
    %v384 = vrot.slane %v379, %v383
    %v402 = vunpack.c.l.b16 %v363
    %v403 = vunpack.c.l.b16 %v364
    %v404 = vunpack.c.l.b16 %v365
    %v405 = vunpack.c.l.b16 %v366
    %v406 = vunpack.c.l.b16 %v367
    %v407 = vunpack.c.l.b16 %v368
    %v408 = vunpack.c.l.b16 %v369
    %v409 = vunpack.c.l.b16 %v370
    %v410 = vunpack.c.l.b16 %v371
    %v411 = vunpack.c.l.b16 %v372
    %v412 = vunpack.c.l.b16 %v373
    %v413 = vunpack.c.l.b16 %v374
    %v414 = vunpack.c.l.b16 %v375
    %v415 = vunpack.c.l.b16 %v376
    %v416 = vunpack.c.l.b16 %v377
    %v417 = vunpack.c.l.b16 %v378
    %v418 = vpack.c.b16 %v403, %v402
    %v419 = vpack.c.b16 %v405, %v404
    %v420 = vpack.c.b16 %v407, %v406
    %v421 = vpack.c.b16 %v409, %v408
    %v422 = vpack.c.b16 %v411, %v410
    %v423 = vpack.c.b16 %v413, %v412
    %v424 = vpack.c.b16 %v415, %v414
    %v425 = vpack.c.b16 %v417, %v416
    %434 = vmatprep.subr.bf16.mxu0 0
    %435 = vmatpush1.bf16.msra.mxu0 %v418
    %436 = vmatprep.subr.bf16.mxu0 0
    %437 = vmatpush1.bf16.msra.mxu0 %v419
    %438 = vmatprep.subr.bf16.mxu0 0
    %439 = vmatpush1.bf16.msra.mxu0 %v420
    %440 = vmatprep.subr.bf16.mxu0 0
    %441 = vmatpush1.bf16.msra.mxu0 %v421
    %442 = vmatprep.subr.bf16.mxu0 0
    %443 = vmatpush1.bf16.msra.mxu0 %v422
    %444 = vmatprep.subr.bf16.mxu0 0
    %445 = vmatpush1.bf16.msra.mxu0 %v423
    %446 = vmatprep.subr.bf16.mxu0 0
    %447 = vmatpush1.bf16.msra.mxu0 %v424
    %448 = vmatprep.subr.bf16.mxu0 0
    %449 = vmatpush1.bf16.msra.mxu0 %v425
    %450 = vmatprep.subr.bf16.mxu0 0
    %451 = vmatpush1.bf16.msra.mxu0 0
    %452 = vmatprep.subr.bf16.mxu0 0
    %453 = vmatpush1.bf16.msra.mxu0 0
    %454 = vmatprep.subr.bf16.mxu0 0
    %455 = vmatpush1.bf16.msra.mxu0 0
    %456 = vmatprep.subr.bf16.mxu0 0
    %457 = vmatpush1.bf16.msra.mxu0 0
    %458 = vmatprep.subr.bf16.mxu0 0
    %459 = vmatpush1.bf16.msra.mxu0 0
    %460 = vmatprep.subr.bf16.mxu0 0
    %461 = vmatpush1.bf16.msra.mxu0 0
    %462 = vmatprep.subr.bf16.mxu0 0
    %463 = vmatpush1.bf16.msra.mxu0 0
    %464 = vmatprep.subr.bf16.mxu0 0
    %465 = vmatpush1.bf16.msra.mxu0 0
    %466 = vmatprep.mubr.bf16.mxu0 0
    %467 = vmatmul.mubr.bf16.gmra.mrb[0].mxu0 %v350
    %v468 = vpop.f32.mrb[0].mxu0
    %v469 = vadd.f32 %v384, %v468
    %v470 = vpop.f32.mrb[0].mxu0
    %v471 = vpop.f32.mrb[0].mxu0
    %v472 = vadd.f32 %v384, %v471
    %v473 = vpop.f32.mrb[0].mxu0
    %474 = vmatprep.mubr.bf16.mxu0 0
    %475 = vmatmul.mubr.bf16.gmra.mrb[0].mxu0 %v351
    %v476 = vpop.f32.mrb[0].mxu0
    %v477 = vadd.f32 %v384, %v476
    %v478 = vpop.f32.mrb[0].mxu0
    %v479 = vpop.f32.mrb[0].mxu0
    %v480 = vadd.f32 %v384, %v479
    %v481 = vpop.f32.mrb[0].mxu0
    %482 = vmatprep.mubr.bf16.mxu0 0
    %483 = vmatmul.mubr.bf16.gmra.mrb[0].mxu0 %v352
    %v484 = vpop.f32.mrb[0].mxu0
    %v485 = vadd.f32 %v384, %v484
    %v486 = vpop.f32.mrb[0].mxu0
    %v487 = vpop.f32.mrb[0].mxu0
    %v488 = vadd.f32 %v384, %v487
    %v489 = vpop.f32.mrb[0].mxu0
    %490 = vmatprep.mubr.bf16.mxu0 0
    %491 = vmatmul.mubr.bf16.gmra.mrb[0].mxu0 %v353
    %v492 = vpop.f32.mrb[0].mxu0
    %v493 = vadd.f32 %v384, %v492
    %v494 = vpop.f32.mrb[0].mxu0
    %v495 = vpop.f32.mrb[0].mxu0
    %v496 = vadd.f32 %v384, %v495
    %v497 = vpop.f32.mrb[0].mxu0
    %498 = vmatprep.mubr.bf16.mxu0 0
    %499 = vmatmul.mubr.bf16.gmra.mrb[0].mxu0 %v354
    %v500 = vpop.f32.mrb[0].mxu0
    %v501 = vadd.f32 %v384, %v500
    %v502 = vpop.f32.mrb[0].mxu0
    %v503 = vpop.f32.mrb[0].mxu0
    %v504 = vadd.f32 %v384, %v503
    %v505 = vpop.f32.mrb[0].mxu0
    %506 = vmatprep.mubr.bf16.mxu0 0
    %507 = vmatmul.mubr.bf16.gmra.mrb[0].mxu0 %v355
    %v508 = vpop.f32.mrb[0].mxu0
    %v509 = vadd.f32 %v384, %v508
    %v510 = vpop.f32.mrb[0].mxu0
    %v511 = vpop.f32.mrb[0].mxu0
    %v512 = vadd.f32 %v384, %v511
    %v513 = vpop.f32.mrb[0].mxu0
    %514 = vmatprep.mubr.bf16.mxu0 0
    %515 = vmatmul.mubr.bf16.gmra.mrb[0].mxu0 %v356
    %v516 = vpop.f32.mrb[0].mxu0
    %v517 = vadd.f32 %v384, %v516
    %v518 = vpop.f32.mrb[0].mxu0
    %v519 = vpop.f32.mrb[0].mxu0
    %v520 = vadd.f32 %v384, %v519
    %v521 = vpop.f32.mrb[0].mxu0
    %522 = vmatprep.mubr.bf16.mxu0 0
    %523 = vmatmul.mubr.bf16.gmra.mrb[0].mxu0 %v357
    %v524 = vpop.f32.mrb[0].mxu0
    %v525 = vadd.f32 %v384, %v524
    %v526 = vpop.f32.mrb[0].mxu0
    %v527 = vpop.f32.mrb[0].mxu0
    %v528 = vadd.f32 %v384, %v527
    %v529 = vpop.f32.mrb[0].mxu0
    %530 = vmatprep.mubr.bf16.mxu0 0
    %531 = vmatmul.mubr.bf16.gmra.mrb[0].mxu0 %v358
    %v532 = vpop.f32.mrb[0].mxu0
    %v533 = vadd.f32 %v384, %v532
    %v534 = vpop.f32.mrb[0].mxu0
    %v535 = vpop.f32.mrb[0].mxu0
    %v536 = vadd.f32 %v384, %v535
    %v537 = vpop.f32.mrb[0].mxu0
    %538 = vmatprep.mubr.bf16.mxu0 0
    %539 = vmatmul.mubr.bf16.gmra.mrb[0].mxu0 %v359
    %v540 = vpop.f32.mrb[0].mxu0
    %v541 = vadd.f32 %v384, %v540
    %v542 = vpop.f32.mrb[0].mxu0
    %v543 = vpop.f32.mrb[0].mxu0
    %v544 = vadd.f32 %v384, %v543
    %v545 = vpop.f32.mrb[0].mxu0
    %546 = vmatprep.mubr.bf16.mxu0 0
    %547 = vmatmul.mubr.bf16.gmra.mrb[0].mxu0 %v360
    %v548 = vpop.f32.mrb[0].mxu0
    %v549 = vadd.f32 %v384, %v548
    %v550 = vpop.f32.mrb[0].mxu0
    %v551 = vpop.f32.mrb[0].mxu0
    %v552 = vadd.f32 %v384, %v551
    %v553 = vpop.f32.mrb[0].mxu0
    %554 = vmatprep.mubr.bf16.mxu0 0
    %555 = vmatmul.mubr.bf16.gmra.mrb[0].mxu0 %v361
    %v556 = vpop.f32.mrb[0].mxu0
    %v557 = vadd.f32 %v384, %v556
    %v558 = vpop.f32.mrb[0].mxu0
    %v559 = vpop.f32.mrb[0].mxu0
    %v560 = vadd.f32 %v384, %v559
    %v561 = vpop.f32.mrb[0].mxu0
    %562 = vmatprep.mubr.bf16.mxu0 0
    %563 = vmatmul.mubr.bf16.gmra.mrb[0].mxu0 %v362
    %v564 = vpop.f32.mrb[0].mxu0
    %v565 = vadd.f32 %v384, %v564
    %v566 = vpop.f32.mrb[0].mxu0
    %v567 = vpop.f32.mrb[0].mxu0
    %v568 = vpop.f32.mrb[0].mxu0
    %569 = vdwg.mxu0
    %v570 = vmax.f32 %v469, 0.0
    %v571 = vmax.f32 %v472, 0.0
    %v572 = vmax.f32 %v477, 0.0
    %v573 = vmax.f32 %v480, 0.0
    %v574 = vmax.f32 %v485, 0.0
    %v575 = vmax.f32 %v488, 0.0
    %v576 = vmax.f32 %v493, 0.0
    %v577 = vmax.f32 %v496, 0.0
    %v578 = vmax.f32 %v501, 0.0
    %v579 = vmax.f32 %v504, 0.0
    %v580 = vmax.f32 %v509, 0.0
    %v581 = vmax.f32 %v512, 0.0
    %v582 = vmax.f32 %v517, 0.0
    %v583 = vmax.f32 %v520, 0.0
    %v584 = vmax.f32 %v525, 0.0
    %v585 = vmax.f32 %v528, 0.0
    %v586 = vmax.f32 %v533, 0.0
    %v587 = vmax.f32 %v536, 0.0
    %v588 = vmax.f32 %v541, 0.0
    %v589 = vmax.f32 %v544, 0.0
    %v590 = vmax.f32 %v549, 0.0
    %v591 = vmax.f32 %v552, 0.0
    %v592 = vmax.f32 %v557, 0.0
    %v593 = vmax.f32 %v560, 0.0
    %v594 = vmax.f32 %v565, 0.0
    %v595 = vpack.c.bf16 %v571, %v570
    %v596 = vpack.c.bf16 %v573, %v572
    %v597 = vpack.c.bf16 %v575, %v574
    %v598 = vpack.c.bf16 %v577, %v576
    %v599 = vpack.c.bf16 %v579, %v578
    %v600 = vpack.c.bf16 %v581, %v580
    %v601 = vpack.c.bf16 %v583, %v582
    %v602 = vpack.c.bf16 %v585, %v584
    %v603 = vpack.c.bf16 %v587, %v586
    %v604 = vpack.c.bf16 %v589, %v588
    %v605 = vpack.c.bf16 %v591, %v590
    %v606 = vpack.c.bf16 %v593, %v592
    %v607 = vpack.c.bf16 %v594, %v594
    %v608 = vld [vmem:[%s5] sm:$0xf]
    %v609 = vld [vmem:[%s5 + $0x4] sm:$0xf]
    %v610 = vld [vmem:[%s5 + $0x8] sm:$0xf]
    %v611 = vld [vmem:[%s5 + $0xc] sm:$0xf]
    %v612 = vld [vmem:[%s5 + $0x10] sm:$0xf]
    %v613 = vld [vmem:[%s5 + $0x14] sm:$0xf]
    %v614 = vld [vmem:[%s5 + $0x18] sm:$0xf]
    %v615 = vld [vmem:[%s5 + $0x1c] sm:$0xf]
    %v616 = vld [vmem:[%s5 + $0x20] sm:$0xf]
    %v617 = vld [vmem:[%s5 + $0x24] sm:$0xf]
    %v618 = vld [vmem:[%s5 + $0x28] sm:$0xf]
    %v619 = vld [vmem:[%s5 + $0x2c] sm:$0xf]
    %v620 = vld [vmem:[%s5 + $0x30] sm:$0xf]
    %v621 = vld [vmem:[%s5 + $0x34] sm:$0xf]
    %v622 = vld [vmem:[%s5 + $0x38] sm:$0xf]
    %v623 = vld [vmem:[%s5 + $0x3c] sm:$0xf]
    %v640 = vunpack.c.l.b16 %v608
    %v641 = vunpack.c.l.b16 %v609
    %v642 = vunpack.c.l.b16 %v610
    %v643 = vunpack.c.l.b16 %v611
    %v644 = vunpack.c.l.b16 %v612
    %v645 = vunpack.c.l.b16 %v613
    %v646 = vunpack.c.l.b16 %v614
    %v647 = vunpack.c.l.b16 %v615
    %v648 = vunpack.c.l.b16 %v616
    %v649 = vunpack.c.l.b16 %v617
    %v650 = vunpack.c.l.b16 %v618
    %v651 = vunpack.c.l.b16 %v619
    %v652 = vunpack.c.l.b16 %v620
    %v653 = vunpack.c.l.b16 %v621
    %v654 = vunpack.c.l.b16 %v622
    %v655 = vunpack.c.l.b16 %v623
    %v656 = vpack.c.b16 %v641, %v640
    %v657 = vpack.c.b16 %v643, %v642
    %v658 = vpack.c.b16 %v645, %v644
    %v659 = vpack.c.b16 %v647, %v646
    %v660 = vpack.c.b16 %v649, %v648
    %v661 = vpack.c.b16 %v651, %v650
    %v662 = vpack.c.b16 %v653, %v652
    %v663 = vpack.c.b16 %v655, %v654
    %672 = vmatprep.subr.bf16.mxu0 0
    %673 = vmatpush1.bf16.msra.mxu0 %v656
    %674 = vmatprep.subr.bf16.mxu0 0
    %675 = vmatpush1.bf16.msra.mxu0 %v657
    %676 = vmatprep.subr.bf16.mxu0 0
    %677 = vmatpush1.bf16.msra.mxu0 %v658
    %678 = vmatprep.subr.bf16.mxu0 0
    %679 = vmatpush1.bf16.msra.mxu0 %v659
    %680 = vmatprep.subr.bf16.mxu0 0
    %681 = vmatpush1.bf16.msra.mxu0 %v660
    %682 = vmatprep.subr.bf16.mxu0 0
    %683 = vmatpush1.bf16.msra.mxu0 %v661
    %684 = vmatprep.subr.bf16.mxu0 0
    %685 = vmatpush1.bf16.msra.mxu0 %v662
    %686 = vmatprep.subr.bf16.mxu0 0
    %687 = vmatpush1.bf16.msra.mxu0 %v663
    %688 = vmatprep.subr.bf16.mxu0 0
    %689 = vmatpush1.bf16.msra.mxu0 0
    %690 = vmatprep.subr.bf16.mxu0 0
    %691 = vmatpush1.bf16.msra.mxu0 0
    %692 = vmatprep.subr.bf16.mxu0 0
    %693 = vmatpush1.bf16.msra.mxu0 0
    %694 = vmatprep.subr.bf16.mxu0 0
    %695 = vmatpush1.bf16.msra.mxu0 0
    %696 = vmatprep.subr.bf16.mxu0 0
    %697 = vmatpush1.bf16.msra.mxu0 0
    %698 = vmatprep.subr.bf16.mxu0 0
    %699 = vmatpush1.bf16.msra.mxu0 0
    %700 = vmatprep.subr.bf16.mxu0 0
    %701 = vmatpush1.bf16.msra.mxu0 0
    %702 = vmatprep.subr.bf16.mxu0 0
    %703 = vmatpush1.bf16.msra.mxu0 0
    %704 = vmatprep.mubr.bf16.mxu0 0
    %705 = vmatmul.mubr.bf16.gmra.mrb[0].mxu0 %v595
    %v706 = vpop.f32.mrb[0].mxu0
    %v707 = vadd.f32 0.0, %v706
    %v708 = vpop.f32.mrb[0].mxu0
    %v709 = vpop.f32.mrb[0].mxu0
    %v710 = vadd.f32 0.0, %v709
    %v711 = vpop.f32.mrb[0].mxu0
    %712 = vmatprep.mubr.bf16.mxu0 0
    %713 = vmatmul.mubr.bf16.gmra.mrb[0].mxu0 %v596
    %v714 = vpop.f32.mrb[0].mxu0
    %v715 = vadd.f32 0.0, %v714
    %v716 = vpop.f32.mrb[0].mxu0
    %v717 = vpop.f32.mrb[0].mxu0
    %v718 = vadd.f32 0.0, %v717
    %v719 = vpop.f32.mrb[0].mxu0
    %720 = vmatprep.mubr.bf16.mxu0 0
    %721 = vmatmul.mubr.bf16.gmra.mrb[0].mxu0 %v597
    %v722 = vpop.f32.mrb[0].mxu0
    %v723 = vadd.f32 0.0, %v722
    %v724 = vpop.f32.mrb[0].mxu0
    %v725 = vpop.f32.mrb[0].mxu0
    %v726 = vadd.f32 0.0, %v725
    %v727 = vpop.f32.mrb[0].mxu0
    %728 = vmatprep.mubr.bf16.mxu0 0
    %729 = vmatmul.mubr.bf16.gmra.mrb[0].mxu0 %v598
    %v730 = vpop.f32.mrb[0].mxu0
    %v731 = vadd.f32 0.0, %v730
    %v732 = vpop.f32.mrb[0].mxu0
    %v733 = vpop.f32.mrb[0].mxu0
    %v734 = vadd.f32 0.0, %v733
    %v735 = vpop.f32.mrb[0].mxu0
    %736 = vmatprep.mubr.bf16.mxu0 0
    %737 = vmatmul.mubr.bf16.gmra.mrb[0].mxu0 %v599
    %v738 = vpop.f32.mrb[0].mxu0
    %v739 = vadd.f32 0.0, %v738
    %v740 = vpop.f32.mrb[0].mxu0
    %v741 = vpop.f32.mrb[0].mxu0
    %v742 = vadd.f32 0.0, %v741
    %v743 = vpop.f32.mrb[0].mxu0
    %744 = vmatprep.mubr.bf16.mxu0 0
    %745 = vmatmul.mubr.bf16.gmra.mrb[0].mxu0 %v600
    %v746 = vpop.f32.mrb[0].mxu0
    %v747 = vadd.f32 0.0, %v746
    %v748 = vpop.f32.mrb[0].mxu0
    %v749 = vpop.f32.mrb[0].mxu0
    %v750 = vadd.f32 0.0, %v749
    %v751 = vpop.f32.mrb[0].mxu0
    %752 = vmatprep.mubr.bf16.mxu0 0
    %753 = vmatmul.mubr.bf16.gmra.mrb[0].mxu0 %v601
    %v754 = vpop.f32.mrb[0].mxu0
    %v755 = vadd.f32 0.0, %v754
    %v756 = vpop.f32.mrb[0].mxu0
    %v757 = vpop.f32.mrb[0].mxu0
    %v758 = vadd.f32 0.0, %v757
    %v759 = vpop.f32.mrb[0].mxu0
    %760 = vmatprep.mubr.bf16.mxu0 0
    %761 = vmatmul.mubr.bf16.gmra.mrb[0].mxu0 %v602
    %v762 = vpop.f32.mrb[0].mxu0
    %v763 = vadd.f32 0.0, %v762
    %v764 = vpop.f32.mrb[0].mxu0
    %v765 = vpop.f32.mrb[0].mxu0
    %v766 = vadd.f32 0.0, %v765
    %v767 = vpop.f32.mrb[0].mxu0
    %768 = vmatprep.mubr.bf16.mxu0 0
    %769 = vmatmul.mubr.bf16.gmra.mrb[0].mxu0 %v603
    %v770 = vpop.f32.mrb[0].mxu0
    %v771 = vadd.f32 0.0, %v770
    %v772 = vpop.f32.mrb[0].mxu0
    %v773 = vpop.f32.mrb[0].mxu0
    %v774 = vadd.f32 0.0, %v773
    %v775 = vpop.f32.mrb[0].mxu0
    %776 = vmatprep.mubr.bf16.mxu0 0
    %777 = vmatmul.mubr.bf16.gmra.mrb[0].mxu0 %v604
    %v778 = vpop.f32.mrb[0].mxu0
    %v779 = vadd.f32 0.0, %v778
    %v780 = vpop.f32.mrb[0].mxu0
    %v781 = vpop.f32.mrb[0].mxu0
    %v782 = vadd.f32 0.0, %v781
    %v783 = vpop.f32.mrb[0].mxu0
    %784 = vmatprep.mubr.bf16.mxu0 0
    %785 = vmatmul.mubr.bf16.gmra.mrb[0].mxu0 %v605
    %v786 = vpop.f32.mrb[0].mxu0
    %v787 = vadd.f32 0.0, %v786
    %v788 = vpop.f32.mrb[0].mxu0
    %v789 = vpop.f32.mrb[0].mxu0
    %v790 = vadd.f32 0.0, %v789
    %v791 = vpop.f32.mrb[0].mxu0
    %792 = vmatprep.mubr.bf16.mxu0 0
    %793 = vmatmul.mubr.bf16.gmra.mrb[0].mxu0 %v606
    %v794 = vpop.f32.mrb[0].mxu0
    %v795 = vadd.f32 0.0, %v794
    %v796 = vpop.f32.mrb[0].mxu0
    %v797 = vpop.f32.mrb[0].mxu0
    %v798 = vadd.f32 0.0, %v797
    %v799 = vpop.f32.mrb[0].mxu0
    %800 = vmatprep.mubr.bf16.mxu0 0
    %801 = vmatmul.mubr.bf16.gmra.mrb[0].mxu0 %v607
    %v802 = vpop.f32.mrb[0].mxu0
    %v803 = vadd.f32 0.0, %v802
    %v804 = vpop.f32.mrb[0].mxu0
    %v805 = vpop.f32.mrb[0].mxu0
    %v806 = vpop.f32.mrb[0].mxu0
    %807 = vdwg.mxu0
    %v808 = vsub.f32 0.0, %v707
    %v809 = vsub.f32 0.0, %v710
    %v810 = vsub.f32 0.0, %v715
    %v811 = vsub.f32 0.0, %v718
    %v812 = vsub.f32 0.0, %v723
    %v813 = vsub.f32 0.0, %v726
    %v814 = vsub.f32 0.0, %v731
    %v815 = vsub.f32 0.0, %v734
    %v816 = vsub.f32 0.0, %v739
    %v817 = vsub.f32 0.0, %v742
    %v818 = vsub.f32 0.0, %v747
    %v819 = vsub.f32 0.0, %v750
    %v820 = vsub.f32 0.0, %v755
    %v821 = vsub.f32 0.0, %v758
    %v822 = vsub.f32 0.0, %v763
    %v823 = vsub.f32 0.0, %v766
    %v824 = vsub.f32 0.0, %v771
    %v825 = vsub.f32 0.0, %v774
    %v826 = vsub.f32 0.0, %v779
    %v827 = vsub.f32 0.0, %v782
    %v828 = vsub.f32 0.0, %v787
    %v829 = vsub.f32 0.0, %v790
    %v830 = vsub.f32 0.0, %v795
    %v831 = vsub.f32 0.0, %v798
    %v832 = vsub.f32 0.0, %v803
    %v833 = vmul.f32 %v808, 1.442695
    %v834 = vpow.pop %v833
    %v835 = vmul.f32 %v809, 1.442695
    %v836 = vpow.pop %v835
    %v837 = vmul.f32 %v810, 1.442695
    %v838 = vpow.pop %v837
    %v839 = vmul.f32 %v811, 1.442695
    %v840 = vpow.pop %v839
    %v841 = vmul.f32 %v812, 1.442695
    %v842 = vpow.pop %v841
    %v843 = vmul.f32 %v813, 1.442695
    %v844 = vpow.pop %v843
    %v845 = vmul.f32 %v814, 1.442695
    %v846 = vpow.pop %v845
    %v847 = vmul.f32 %v815, 1.442695
    %v848 = vpow.pop %v847
    %v849 = vmul.f32 %v816, 1.442695
    %v850 = vpow.pop %v849
    %v851 = vmul.f32 %v817, 1.442695
    %v852 = vpow.pop %v851
    %v853 = vmul.f32 %v818, 1.442695
    %v854 = vpow.pop %v853
    %v855 = vmul.f32 %v819, 1.442695
    %v856 = vpow.pop %v855
    %v857 = vmul.f32 %v820, 1.442695
    %v858 = vpow.pop %v857
    %v859 = vmul.f32 %v821, 1.442695
    %v860 = vpow.pop %v859
    %v861 = vmul.f32 %v822, 1.442695
    %v862 = vpow.pop %v861
    %v863 = vmul.f32 %v823, 1.442695
    %v864 = vpow.pop %v863
    %v865 = vmul.f32 %v824, 1.442695
    %v866 = vpow.pop %v865
    %v867 = vmul.f32 %v825, 1.442695
    %v868 = vpow.pop %v867
    %v869 = vmul.f32 %v826, 1.442695
    %v870 = vpow.pop %v869
    %v871 = vmul.f32 %v827, 1.442695
    %v872 = vpow.pop %v871
    %v873 = vmul.f32 %v828, 1.442695
    %v874 = vpow.pop %v873
    %v875 = vmul.f32 %v829, 1.442695
    %v876 = vpow.pop %v875
    %v877 = vmul.f32 %v830, 1.442695
    %v878 = vpow.pop %v877
    %v879 = vmul.f32 %v831, 1.442695
    %v880 = vpow.pop %v879
    %v881 = vmul.f32 %v832, 1.442695
    %v882 = vpow.pop %v881
    %v883 = vadd.f32 %v834, 1.0
    %v884 = vadd.f32 %v836, 1.0
    %v885 = vadd.f32 %v838, 1.0
    %v886 = vadd.f32 %v840, 1.0
    %v887 = vadd.f32 %v842, 1.0
    %v888 = vadd.f32 %v844, 1.0
    %v889 = vadd.f32 %v846, 1.0
    %v890 = vadd.f32 %v848, 1.0
    %v891 = vadd.f32 %v850, 1.0
    %v892 = vadd.f32 %v852, 1.0
    %v893 = vadd.f32 %v854, 1.0
    %v894 = vadd.f32 %v856, 1.0
    %v895 = vadd.f32 %v858, 1.0
    %v896 = vadd.f32 %v860, 1.0
    %v897 = vadd.f32 %v862, 1.0
    %v898 = vadd.f32 %v864, 1.0
    %v899 = vadd.f32 %v866, 1.0
    %v900 = vadd.f32 %v868, 1.0
    %v901 = vadd.f32 %v870, 1.0
    %v902 = vadd.f32 %v872, 1.0
    %v903 = vadd.f32 %v874, 1.0
    %v904 = vadd.f32 %v876, 1.0
    %v905 = vadd.f32 %v878, 1.0
    %v906 = vadd.f32 %v880, 1.0
    %v907 = vadd.f32 %v882, 1.0
    %v908 = vrcp.pop %v883
    %v909 = vrcp.pop %v884
    %v910 = vrcp.pop %v885
    %v911 = vrcp.pop %v886
    %v912 = vrcp.pop %v887
    %v913 = vrcp.pop %v888
    %v914 = vrcp.pop %v889
    %v915 = vrcp.pop %v890
    %v916 = vrcp.pop %v891
    %v917 = vrcp.pop %v892
    %v918 = vrcp.pop %v893
    %v919 = vrcp.pop %v894
    %v920 = vrcp.pop %v895
    %v921 = vrcp.pop %v896
    %v922 = vrcp.pop %v897
    %v923 = vrcp.pop %v898
    %v924 = vrcp.pop %v899
    %v925 = vrcp.pop %v900
    %v926 = vrcp.pop %v901
    %v927 = vrcp.pop %v902
    %v928 = vrcp.pop %v903
    %v929 = vrcp.pop %v904
    %v930 = vrcp.pop %v905
    %v931 = vrcp.pop %v906
    %v932 = vrcp.pop %v907
    %933 = vst [vmem:[%s6] sm:$0xff] %v908
    %934 = vst [vmem:[%s6 + $0x8] sm:$0xff] %v909
    %935 = vst [vmem:[%s6 + $0x10] sm:$0xff] %v910
    %936 = vst [vmem:[%s6 + $0x18] sm:$0xff] %v911
    %937 = vst [vmem:[%s6 + $0x20] sm:$0xff] %v912
    %938 = vst [vmem:[%s6 + $0x28] sm:$0xff] %v913
    %939 = vst [vmem:[%s6 + $0x30] sm:$0xff] %v914
    %940 = vst [vmem:[%s6 + $0x38] sm:$0xff] %v915
    %941 = vst [vmem:[%s6 + $0x40] sm:$0xff] %v916
    %942 = vst [vmem:[%s6 + $0x48] sm:$0xff] %v917
    %943 = vst [vmem:[%s6 + $0x50] sm:$0xff] %v918
    %944 = vst [vmem:[%s6 + $0x58] sm:$0xff] %v919
    %945 = vst [vmem:[%s6 + $0x60] sm:$0xff] %v920
    %946 = vst [vmem:[%s6 + $0x68] sm:$0xff] %v921
    %947 = vst [vmem:[%s6 + $0x70] sm:$0xff] %v922
    %948 = vst [vmem:[%s6 + $0x78] sm:$0xff] %v923
    %949 = vst [vmem:[%s6 + $0x80] sm:$0xff] %v924
    %950 = vst [vmem:[%s6 + $0x88] sm:$0xff] %v925
    %951 = vst [vmem:[%s6 + $0x90] sm:$0xff] %v926
    %952 = vst [vmem:[%s6 + $0x98] sm:$0xff] %v927
    %953 = vst [vmem:[%s6 + $0xa0] sm:$0xff] %v928
    %954 = vst [vmem:[%s6 + $0xa8] sm:$0xff] %v929
    %955 = vst [vmem:[%s6 + $0xb0] sm:$0xff] %v930
    %956 = vst [vmem:[%s6 + $0xb8] sm:$0xff] %v931
    %957 = vst [vmem:[%s6 + $0xc0] sm:$0xff] %v932
    // Predicated region
    $region30: #{mlp_forward.1} parent=1 // pred_check
      _
    $region31: #{mlp_forward.1} parent=1 // pred_check_branch
      %959 = sbr.rel (0) target = $region33
    $region32: #{mlp_forward.1} parent=1 // pred_region
      _
    $region33: #{mlp_forward.1} parent=1 // pred_fallthru
      _
    // Predicated region
    $region34: #{mlp_forward.1} parent=1 // pred_check
      _
    $region35: #{mlp_forward.1} parent=1 // pred_check_branch
      %961 = sbr.rel (0) target = $region37
    $region36: #{mlp_forward.1} parent=1 // pred_region
      _
    $region37: #{mlp_forward.1} parent=1 // pred_fallthru
      _
    %962 = vsyncpa [#allocation3], 1

</llo_original>
